<compile_context>
chip_gen: v6e
topology: v6e:2x2x1
jax: 0.10.0
libtpu: 0.0.40
codegen_flags: <defaults>
</compile_context>

<pallas_src>
import jax
import jax.numpy as jnp
from jax.experimental import pallas as pl
from jax.experimental.pallas import tpu as pltpu


def _protein_conv_kernel(a_ref, x_ref, th_ref, o_ref):
    """One stacked ProteinConv problem per grid step.

    a_ref : (G, B, B)   f32 SMEM  -- spatial-attention scalars for every stacked problem
    x_ref : (B*N, Fi)   f32 VMEM  -- grid-g slab of x, rows ordered (batch, class)
    th_ref: (K, Fi, Fo) f32 VMEM  -- Chebyshev weights (same block every step)
    o_ref : (B*N, Fo)   f32 VMEM  -- grid-g slab of the output
    """
    g = pl.program_id(0)
    B = a_ref.shape[1]
    BN = x_ref.shape[0]
    N = BN // B

    # Hoist the K-sum out of the matmul: sum_k rhs @ Theta[k] == rhs @ (sum_k Theta[k]).
    theta_sum = jnp.sum(th_ref[...], axis=0)                                  # (Fi, Fo)

    # One full-width MXU matmul (no dependence on the SMEM scalars) ...
    y = jnp.dot(x_ref[...], theta_sum, preferred_element_type=jnp.float32)    # (BN, Fo)

    # ... then the depth-B batch mix on the VPU (B, N are tiny static ints -> fully unrolled;
    # N is guaranteed a multiple of 8 by the wrapper, so these slices are aligned views).
    for b in range(B):
        mixed = a_ref[g, b, 0] * y[0:N, :]
        for bp in range(1, B):
            mixed = mixed + a_ref[g, b, bp] * y[bp * N:(bp + 1) * N, :]
        o_ref[b * N:(b + 1) * N, :] = mixed


def protein_conv_stacked(x, spatial_attention, theta):
    """G stacked ProteinConv problems in one pallas_call.

    x: (G, B, N, F_in) f32; spatial_attention: (G, B, B) f32; theta: (K, F_in, F_out) f32.
    Returns (G, B, N, F_out) f32.
    """
    G, B, N, Fi = x.shape
    K, Fi2, Fo = theta.shape
    assert Fi2 == Fi
    assert spatial_attention.shape == (G, B, B)

    # Keep per-batch row blocks on (8,128) sublane boundaries: pad N up to a multiple of 8.
    n_pad = (-(-N // 8)) * 8
    if n_pad != N:
        x = jnp.pad(x, ((0, 0), (0, 0), (0, n_pad - N), (0, 0)))
    bn = B * n_pad

    # Free view: rows ordered exactly as torch's reshape((B, N*Fi)) -> reshape((B*N, Fi)).
    x2d = x.reshape(G, bn, Fi).astype(jnp.float32)
    a = spatial_attention.astype(jnp.float32)
    th = theta.astype(jnp.float32)

    flops = int(G * (2 * bn * Fi * Fo + 2 * B * bn * Fo))
    bytes_accessed = int(4 * (G * bn * Fi + K * Fi * Fo + G * B * B + G * bn * Fo))

    out2d = pl.pallas_call(
        _protein_conv_kernel,
        out_shape=jax.ShapeDtypeStruct((G, bn, Fo), jnp.float32),
        grid=(G,),
        in_specs=[
            # Whole attention stack as SMEM scalars (tiny), indexed by program_id inside.
            pl.BlockSpec(memory_space=pltpu.MemorySpace.SMEM),
            # Per-g x slab; leading dim squeezed out of the kernel ref.
            pl.BlockSpec((None, bn, Fi), lambda g: (g, 0, 0)),
            # Theta: same block every step (read-only, not re-DMA'd).
            pl.BlockSpec((K, Fi, Fo), lambda g: (0, 0, 0)),
        ],
        out_specs=pl.BlockSpec((None, bn, Fo), lambda g: (g, 0, 0)),
        compiler_params=pltpu.CompilerParams(
            # Disjoint output blocks per g -> safe to shard across v7x's 2 TensorCores.
            dimension_semantics=("parallel",)),
        cost_estimate=pl.CostEstimate(
            flops=flops, transcendentals=0, bytes_accessed=bytes_accessed),
    )(a, x2d, th)

    out = out2d.reshape(G, B, n_pad, Fo)
    if n_pad != N:
        out = out[:, :, :N, :]
    return out


def protein_conv(x, spatial_attention, theta):
    """Single forward call matching the PyTorch module.

    x: (B, N, F_in) f32; spatial_attention: (B, B) f32; theta: (K, F_in, F_out) f32.
    """
    return protein_conv_stacked(x[None], spatial_attention[None], theta)[0]


def protein_conv_ref(x, spatial_attention, theta):
    """Pure-JAX reference mirroring the PyTorch forward loop exactly (per-k accumulation)."""
    B, N, Fi = x.shape
    K, _, Fo = theta.shape
    out = jnp.zeros((B, N, Fo), jnp.float32)
    for k in range(K):
        gs1 = x.reshape(B, -1)
        rhs = (spatial_attention @ gs1).reshape(B, N, Fi).reshape(-1, Fi)
        out = out + (rhs @ theta[k]).reshape(B, N, Fo)
    return out


if __name__ == "__main__":
    # Small shapes implied by forward: x (batch, nb_classes, F_in); F_out == F_in.
    K, B, N, Fi, Fo = 3, 2, 16, 32, 32

    key = jax.random.PRNGKey(0)
    kx, ka, kt = jax.random.split(key, 3)

    x = jax.random.normal(kx, (B, N, Fi), dtype=jnp.float32)
    spatial_attention = jax.random.normal(ka, (B, B), dtype=jnp.float32)
    # nn.Parameter(FloatTensor(K, Fi, Fo)) is uninitialized in the original module;
    # use a deterministic scaled normal here.
    theta = jax.random.normal(kt, (K, Fi, Fo), dtype=jnp.float32) / jnp.sqrt(
        jnp.float32(Fi))

    # Single-call path (module-equivalent forward).
    out = jax.block_until_ready(protein_conv(x, spatial_attention, theta))
    ref = protein_conv_ref(x, spatial_attention, theta)
    assert out.shape == (B, N, Fo), out.shape
    assert jnp.allclose(out, ref, atol=1e-4, rtol=1e-4), "single-call mismatch vs reference"

    # Stacked/gridded path: G problems in one launch (amortizes launch overhead; the
    # "parallel" grid axis lets v7x's two TensorCores split the stack).
    G = 4
    kxs, kas = jax.random.split(jax.random.PRNGKey(1), 2)
    xs = jax.random.normal(kxs, (G, B, N, Fi), dtype=jnp.float32)
    As = jax.random.normal(kas, (G, B, B), dtype=jnp.float32)
    outs = jax.block_until_ready(protein_conv_stacked(xs, As, theta))
    refs = jnp.stack([protein_conv_ref(xs[g], As[g], theta) for g in range(G)])
    assert outs.shape == (G, B, N, Fo), outs.shape
    assert jnp.allclose(outs, refs, atol=1e-4, rtol=1e-4), "stacked mismatch vs reference"

    print("KERNEL_OK")
</pallas_src>

<mosaic_0001>
module attributes {stable_mosaic.version = 11 : i64} {
  func.func @_protein_conv_kernel(%arg0: i32, %arg1: memref<1x2x2xf32, #tpu.memory_space<smem>>, %arg2: memref<1x32x32xf32, #tpu.memory_space<vmem>>, %arg3: memref<3x32x32xf32, #tpu.memory_space<vmem>>, %arg4: memref<1x32x32xf32, #tpu.memory_space<vmem>>) attributes {dimension_semantics = [#tpu.dimension_semantics<parallel>], iteration_bounds = array<i64: 1>, scalar_prefetch = 0 : i64, scratch_operands = 0 : i64, tpu.core_type = #tpu.core_type<tc>, window_params = [{transform_indices = @transform_0, window_bounds = array<i64: 1, 2, 2>}, {transform_indices = @transform_1, window_bounds = array<i64: 1, 32, 32>}, {pipeline_mode = #tpu.pipeline_mode<synchronous>, transform_indices = @transform_2, window_bounds = array<i64: 3, 32, 32>}, {transform_indices = @transform_3, window_bounds = array<i64: 1, 32, 32>}]} {
    %c0 = arith.constant 0 : index
    %c0_0 = arith.constant 0 : index
    %c0_1 = arith.constant 0 : index
    %0 = vector.load %arg3[%c0, %c0_0, %c0_1] : memref<3x32x32xf32, #tpu.memory_space<vmem>>, vector<3x32x32xf32>
    %cst = arith.constant dense<0.000000e+00> : vector<32x32xf32>
    %1 = vector.multi_reduction <add>, %0, %cst [0] : vector<3x32x32xf32> to vector<32x32xf32>
    %c0_2 = arith.constant 0 : index
    %c0_3 = arith.constant 0 : index
    %c0_4 = arith.constant 0 : index
    %2 = vector.load %arg2[%c0_2, %c0_3, %c0_4] : memref<1x32x32xf32, #tpu.memory_space<vmem>>, vector<1x32x32xf32>
    %3 = vector.shape_cast %2 : vector<1x32x32xf32> to vector<32x32xf32>
    %cst_5 = arith.constant dense<0.000000e+00> : vector<32x32xf32>
    %4 = tpu.matmul %3, %1, %cst_5 {dimension_numbers = #tpu.dot_dimension_numbers<[1], [0], [0], [1], [0, 0, 1, 1], [], []>} : vector<32x32xf32>, vector<32x32xf32>, vector<32x32xf32> -> vector<32x32xf32>
    %5 = arith.index_cast %arg0 : i32 to index
    %c0_6 = arith.constant 0 : index
    %c0_7 = arith.constant 0 : index
    %6 = memref.load %arg1[%5, %c0_6, %c0_7] : memref<1x2x2xf32, #tpu.memory_space<smem>>
    %7 = vector.extract_strided_slice %4 {offsets = [0, 0], sizes = [16, 32], strides = [1, 1]} : vector<32x32xf32> to vector<16x32xf32>
    %8 = vector.broadcast %6 : f32 to vector<16x32xf32>
    %9 = arith.mulf %8, %7 : vector<16x32xf32>
    %10 = arith.index_cast %arg0 : i32 to index
    %c0_8 = arith.constant 0 : index
    %c1 = arith.constant 1 : index
    %11 = memref.load %arg1[%10, %c0_8, %c1] : memref<1x2x2xf32, #tpu.memory_space<smem>>
    %12 = vector.extract_strided_slice %4 {offsets = [16, 0], sizes = [16, 32], strides = [1, 1]} : vector<32x32xf32> to vector<16x32xf32>
    %13 = vector.broadcast %11 : f32 to vector<16x32xf32>
    %14 = arith.mulf %13, %12 : vector<16x32xf32>
    %15 = arith.addf %9, %14 : vector<16x32xf32>
    %c0_9 = arith.constant 0 : index
    %c0_10 = arith.constant 0 : index
    %c0_11 = arith.constant 0 : index
    %16 = vector.load %arg4[%c0_9, %c0_10, %c0_11] : memref<1x32x32xf32, #tpu.memory_space<vmem>>, vector<1x16x32xf32>
    %17 = vector.shape_cast %16 : vector<1x16x32xf32> to vector<16x32xf32>
    %18 = vector.shape_cast %15 : vector<16x32xf32> to vector<1x16x32xf32>
    tpu.vector_store %arg4[%c0_9, %c0_10, %c0_11], %18 {strides = array<i32>} : memref<1x32x32xf32, #tpu.memory_space<vmem>>, vector<1x16x32xf32>,
    %19 = arith.index_cast %arg0 : i32 to index
    %c1_12 = arith.constant 1 : index
    %c0_13 = arith.constant 0 : index
    %20 = memref.load %arg1[%19, %c1_12, %c0_13] : memref<1x2x2xf32, #tpu.memory_space<smem>>
    %21 = vector.extract_strided_slice %4 {offsets = [0, 0], sizes = [16, 32], strides = [1, 1]} : vector<32x32xf32> to vector<16x32xf32>
    %22 = vector.broadcast %20 : f32 to vector<16x32xf32>
    %23 = arith.mulf %22, %21 : vector<16x32xf32>
    %24 = arith.index_cast %arg0 : i32 to index
    %c1_14 = arith.constant 1 : index
    %c1_15 = arith.constant 1 : index
    %25 = memref.load %arg1[%24, %c1_14, %c1_15] : memref<1x2x2xf32, #tpu.memory_space<smem>>
    %26 = vector.extract_strided_slice %4 {offsets = [16, 0], sizes = [16, 32], strides = [1, 1]} : vector<32x32xf32> to vector<16x32xf32>
    %27 = vector.broadcast %25 : f32 to vector<16x32xf32>
    %28 = arith.mulf %27, %26 : vector<16x32xf32>
    %29 = arith.addf %23, %28 : vector<16x32xf32>
    %c0_16 = arith.constant 0 : index
    %c16 = arith.constant 16 : index
    %c0_17 = arith.constant 0 : index
    %30 = vector.load %arg4[%c0_16, %c16, %c0_17] : memref<1x32x32xf32, #tpu.memory_space<vmem>>, vector<1x16x32xf32>
    %31 = vector.shape_cast %30 : vector<1x16x32xf32> to vector<16x32xf32>
    %32 = vector.shape_cast %29 : vector<16x32xf32> to vector<1x16x32xf32>
    tpu.vector_store %arg4[%c0_16, %c16, %c0_17], %32 {strides = array<i32>} : memref<1x32x32xf32, #tpu.memory_space<vmem>>, vector<1x16x32xf32>,
    return
  }
  func.func @transform_0(%arg0: i32) -> (i32, i32, i32) {
    %c0_i32 = arith.constant 0 : i32
    %c0_i32_0 = arith.constant 0 : i32
    %c0_i32_1 = arith.constant 0 : i32
    %c0_i32_2 = arith.constant 0 : i32
    return %c0_i32, %c0_i32_0, %c0_i32_1 : i32, i32, i32
  }
  func.func @transform_1(%arg0: i32) -> (i32, i32, i32) {
    %c0_i32 = arith.constant 0 : i32
    %c0_i32_0 = arith.constant 0 : i32
    %c0_i32_1 = arith.constant 0 : i32
    return %arg0, %c0_i32, %c0_i32_0 : i32, i32, i32
  }
  func.func @transform_2(%arg0: i32) -> (i32, i32, i32) {
    %c0_i32 = arith.constant 0 : i32
    %c0_i32_0 = arith.constant 0 : i32
    %c0_i32_1 = arith.constant 0 : i32
    %c0_i32_2 = arith.constant 0 : i32
    return %c0_i32, %c0_i32_0, %c0_i32_1 : i32, i32, i32
  }
  func.func @transform_3(%arg0: i32) -> (i32, i32, i32) {
    %c0_i32 = arith.constant 0 : i32
    %c0_i32_0 = arith.constant 0 : i32
    %c0_i32_1 = arith.constant 0 : i32
    return %arg0, %c0_i32, %c0_i32_0 : i32, i32, i32
  }
}

</mosaic_0001>

<llo_original>
// kernel: tpu_custom_call.1
$region0: #{tpu_custom_call.1}
  #allocation0 [shape = 'u32[]', space=smem, size = 0x4, offset = 0x4, fixed_abs, tag = 'smem constant byte address 0x4 - core index']
  #allocation1 [shape = 'u32[144,128]{1,0:T(1,128)}', space=vmem, size = 0x12000, scoped, tag = 'internal scratch']
  %s0 = inlined_call_operand.hbm [shape: f32[1,2,2], index: 0, kind: input, shape index: {}]
  %s1 = inlined_call_operand.hbm [shape: f32[1,32,32], index: 1, kind: input, shape index: {}]
  %s2 = inlined_call_operand.hbm [shape: f32[3,32,32], index: 2, kind: input, shape index: {}]
  %s3 = inlined_call_operand.hbm [shape: f32[1,32,32], index: 3, kind: output, shape index: {}]
  %s4 = sld [smem:[#allocation0]]
  $region34: #{tpu_custom_call.1} parent=0
    _
  %s6 = ssub.s32 1, %s4
  %s7 = scalar_select 0, %s6, %s4
  $region1: #{tpu_custom_call.1} parent=0
    #allocation2 [shape = 'u8[1024]{0}', space=smem, size = 0x400, scoped, tag = 'input window, operand 0, single buffered']
    #allocation3 [shape = 's32[1]{0}', space=sflag, size = 0x4, scoped, tag = 'scoped memory for tpu_custom_call.1']
    #allocation4 [shape = 's32[1]{0}', space=sflag, size = 0x4, scoped, tag = 'scoped memory for tpu_custom_call.1']
    #allocation5 [shape = 's32[1]{0}', space=sflag, size = 0x4, scoped, tag = 'scoped memory for tpu_custom_call.1']
    #allocation6 [shape = 'u8[16384]{0}', space=vmem, size = 0x4000, scoped, tag = 'input window, operand 1, single buffered']
    #allocation7 [shape = 'u8[49152]{0}', space=vmem, size = 0xc000, scoped, tag = 'input window, operand 2, single buffered']
    #allocation8 [shape = 's32[1]{0}', space=sflag, size = 0x4, scoped, tag = 'scoped memory for tpu_custom_call.1']
    #allocation9 [shape = 'u8[16384]{0}', space=vmem, size = 0x4000, scoped, tag = 'output window, operand 0, single buffered']
    %8 = vsyncpa [#allocation5], 0
    %9 = vsyncpa [#allocation3], 0
    %10 = vsyncpa [#allocation8], 0
    %11 = vsyncpa [#allocation4], 0
    // Predicated region
    $region2: #{tpu_custom_call.1} parent=1 // pred_check
      _
    $region3: #{tpu_custom_call.1} parent=1 // pred_check_branch
      %13 = sbr.rel (0) target = $region5
    $region4: #{tpu_custom_call.1} parent=1 // pred_region
      %s15 = ssub.s32 32, 32
      %16 = vsyncadd [#allocation5], %s15
      %19 = dma.hbm_to_smem %s0, 32, [#allocation2], [#allocation5]
    $region5: #{tpu_custom_call.1} parent=1 // pred_fallthru
      _
    // Predicated region
    $region6: #{tpu_custom_call.1} parent=1 // pred_check
      _
    $region7: #{tpu_custom_call.1} parent=1 // pred_check_branch
      %21 = sbr.rel (0) target = $region9
    $region8: #{tpu_custom_call.1} parent=1 // pred_region
      %s23 = ssub.s32 512, 512
      %24 = vsyncadd [#allocation3], %s23
      %s25 = sshll.u32 [#allocation6], 4
      %s26 = int_to_ptr.vmem [resolvable:$true] %s25
      %31 = dma.hbm_to_vmem [thread:$0]  %s1, 512, %s26, [#allocation3], 128, 128, 8
    $region9: #{tpu_custom_call.1} parent=1 // pred_fallthru
      _
    // Predicated region
    $region10: #{tpu_custom_call.1} parent=1 // pred_check
      _
    $region11: #{tpu_custom_call.1} parent=1 // pred_check_branch
      %33 = sbr.rel (0) target = $region13
    $region12: #{tpu_custom_call.1} parent=1 // pred_region
      %s35 = ssub.s32 1536, 1536
      %36 = vsyncadd [#allocation8], %s35
      %s37 = sshll.u32 [#allocation7], 4
      %s38 = int_to_ptr.vmem [resolvable:$true] %s37
      %43 = dma.hbm_to_vmem [thread:$0]  %s2, 1536, %s38, [#allocation8], 128, 128, 8
    $region13: #{tpu_custom_call.1} parent=1 // pred_fallthru
      _
    // Predicated region
    $region14: #{tpu_custom_call.1} parent=1 // pred_check
      _
    $region15: #{tpu_custom_call.1} parent=1 // pred_check_branch
      %45 = sbr.rel (0) target = $region17
    $region16: #{tpu_custom_call.1} parent=1 // pred_region
      %46 = dma.done [#allocation5], 32
    $region17: #{tpu_custom_call.1} parent=1 // pred_fallthru
      _
    // Predicated region
    $region18: #{tpu_custom_call.1} parent=1 // pred_check
      _
    $region19: #{tpu_custom_call.1} parent=1 // pred_check_branch
      %48 = sbr.rel (0) target = $region21
    $region20: #{tpu_custom_call.1} parent=1 // pred_region
      %49 = dma.done [#allocation3], 512
    $region21: #{tpu_custom_call.1} parent=1 // pred_fallthru
      _
    // Predicated region
    $region22: #{tpu_custom_call.1} parent=1 // pred_check
      _
    $region23: #{tpu_custom_call.1} parent=1 // pred_check_branch
      %51 = sbr.rel (0) target = $region25
    $region24: #{tpu_custom_call.1} parent=1 // pred_region
      %52 = dma.done [#allocation8], 1536
    $region25: #{tpu_custom_call.1} parent=1 // pred_fallthru
      _
    %53 = sfence
    %v54 = vld [vmem:[#allocation7] sm:$0xff]
    %v55 = vld [vmem:[#allocation7 + $0x8] sm:$0xff]
    %v56 = vld [vmem:[#allocation7 + $0x10] sm:$0xff]
    %v57 = vld [vmem:[#allocation7 + $0x18] sm:$0xff]
    %v58 = vld [vmem:[#allocation7 + $0x20] sm:$0xff]
    %v59 = vld [vmem:[#allocation7 + $0x28] sm:$0xff]
    %v60 = vld [vmem:[#allocation7 + $0x30] sm:$0xff]
    %v61 = vld [vmem:[#allocation7 + $0x38] sm:$0xff]
    %v62 = vld [vmem:[#allocation7 + $0x40] sm:$0xff]
    %v63 = vld [vmem:[#allocation7 + $0x48] sm:$0xff]
    %v64 = vld [vmem:[#allocation7 + $0x50] sm:$0xff]
    %v65 = vld [vmem:[#allocation7 + $0x58] sm:$0xff]
    %vm66 = vcmask 261120
    %v67 = vsel %vm66, %v54, 0.0
    %v68 = vsel %vm66, %v58, 0.0
    %v69 = vadd.f32 %v67, %v68
    %v70 = vsel %vm66, %v62, 0.0
    %v71 = vadd.f32 %v69, %v70
    %v72 = vsel %vm66, %v55, 0.0
    %v73 = vsel %vm66, %v59, 0.0
    %v74 = vadd.f32 %v72, %v73
    %v75 = vsel %vm66, %v63, 0.0
    %v76 = vadd.f32 %v74, %v75
    %v77 = vsel %vm66, %v56, 0.0
    %v78 = vsel %vm66, %v60, 0.0
    %v79 = vadd.f32 %v77, %v78
    %v80 = vsel %vm66, %v64, 0.0
    %v81 = vadd.f32 %v79, %v80
    %v82 = vsel %vm66, %v57, 0.0
    %v83 = vsel %vm66, %v61, 0.0
    %v84 = vadd.f32 %v82, %v83
    %v85 = vsel %vm66, %v65, 0.0
    %v86 = vadd.f32 %v84, %v85
    %v87 = vld [vmem:[#allocation6] sm:$0xff]
    %v88 = vld [vmem:[#allocation6 + $0x8] sm:$0xff]
    %v89 = vld [vmem:[#allocation6 + $0x10] sm:$0xff]
    %v90 = vld [vmem:[#allocation6 + $0x18] sm:$0xff]
    %v92 = vsel %vm66, %v87, 0
    %v95 = vsel %vm66, %v88, 0
    %v98 = vsel %vm66, %v89, 0
    %v101 = vsel %vm66, %v90, 0
    %103 = vmatprep.subr.mxu0 0.0
    %104 = vmatpush1.msra.mxu0 0.0
    %105 = vmatprep.subr.mxu0 0.0
    %106 = vmatpush1.msra.mxu0 0.0
    %107 = vmatprep.subr.mxu0 0.0
    %108 = vmatpush1.msra.mxu0 0.0
    %109 = vmatprep.subr.mxu0 0.0
    %110 = vmatpush1.msra.mxu0 0.0
    %111 = vmatprep.subr.mxu0 0.0
    %112 = vmatpush1.msra.mxu0 0.0
    %113 = vmatprep.subr.mxu0 0.0
    %114 = vmatpush1.msra.mxu0 0.0
    %115 = vmatprep.subr.mxu0 0.0
    %116 = vmatpush1.msra.mxu0 0.0
    %117 = vmatprep.subr.mxu0 0.0
    %118 = vmatpush1.msra.mxu0 0.0
    %119 = vmatprep.subr.mxu0 0.0
    %120 = vmatpush1.msra.mxu0 0.0
    %121 = vmatprep.subr.mxu0 0.0
    %122 = vmatpush1.msra.mxu0 0.0
    %123 = vmatprep.subr.mxu0 0.0
    %124 = vmatpush1.msra.mxu0 0.0
    %125 = vmatprep.subr.mxu0 0.0
    %126 = vmatpush1.msra.mxu0 0.0
    %127 = vmatprep.subr.mxu0 0.0
    %128 = vmatpush1.msra.mxu0 %v86
    %129 = vmatprep.subr.mxu0 0.0
    %130 = vmatpush1.msra.mxu0 %v81
    %131 = vmatprep.subr.mxu0 0.0
    %132 = vmatpush1.msra.mxu0 %v76
    %133 = vmatprep.subr.mxu0 0.0
    %134 = vmatpush1.msra.mxu0 %v71
    %135 = vmatprep.subr.mxu0 0.0
    %136 = vmatpush2.msra.mxu0 0.0
    %137 = vmatprep.subr.mxu0 0.0
    %138 = vmatpush2.msra.mxu0 0.0
    %139 = vmatprep.subr.mxu0 0.0
    %140 = vmatpush2.msra.mxu0 0.0
    %141 = vmatprep.subr.mxu0 0.0
    %142 = vmatpush2.msra.mxu0 0.0
    %143 = vmatprep.subr.mxu0 0.0
    %144 = vmatpush2.msra.mxu0 0.0
    %145 = vmatprep.subr.mxu0 0.0
    %146 = vmatpush2.msra.mxu0 0.0
    %147 = vmatprep.subr.mxu0 0.0
    %148 = vmatpush2.msra.mxu0 0.0
    %149 = vmatprep.subr.mxu0 0.0
    %150 = vmatpush2.msra.mxu0 0.0
    %151 = vmatprep.subr.mxu0 0.0
    %152 = vmatpush2.msra.mxu0 0.0
    %153 = vmatprep.subr.mxu0 0.0
    %154 = vmatpush2.msra.mxu0 0.0
    %155 = vmatprep.subr.mxu0 0.0
    %156 = vmatpush2.msra.mxu0 0.0
    %157 = vmatprep.subr.mxu0 0.0
    %158 = vmatpush2.msra.mxu0 0.0
    %159 = vmatprep.subr.mxu0 0.0
    %160 = vmatpush2.msra.mxu0 0.0
    %161 = vmatprep.subr.mxu0 0.0
    %162 = vmatpush2.msra.mxu0 0.0
    %163 = vmatprep.subr.mxu0 0.0
    %164 = vmatpush2.msra.mxu0 0.0
    %165 = vmatprep.subr.mxu0 0.0
    %166 = vmatpush2.msra.mxu0 0.0
    %167 = vmatprep.mubr.f32.mxu0 0.0
    %168 = vmatmul.mubr.f32.gmra.mxu0 %v92
    %v169 = vpop.f32.mrf.mxu0
    %v170 = vadd.f32 0.0, %v169
    %v171 = vpop.f32.mrf.mxu0
    %172 = vmatprep.mubr.f32.mxu0 0.0
    %173 = vmatmul.mubr.f32.gmra.mxu0 %v95
    %v174 = vpop.f32.mrf.mxu0
    %v175 = vadd.f32 0.0, %v174
    %v176 = vpop.f32.mrf.mxu0
    %177 = vmatprep.mubr.f32.mxu0 0.0
    %178 = vmatmul.mubr.f32.gmra.mxu0 %v98
    %v179 = vpop.f32.mrf.mxu0
    %v180 = vadd.f32 0.0, %v179
    %v181 = vpop.f32.mrf.mxu0
    %182 = vmatprep.mubr.f32.mxu0 0.0
    %183 = vmatmul.mubr.f32.gmra.mxu0 %v101
    %v184 = vpop.f32.mrf.mxu0
    %v185 = vadd.f32 0.0, %v184
    %v186 = vpop.f32.mrf.mxu0
    %187 = vdwg.mxu0
    %s188 = smul.u32 0, 2
    %s189 = smul.u32 %s188, 128
    %s190 = sld [smem:[#allocation2 + %s189]]
    %v191 = vstv %s190
    %v192 = vmul.f32 %v191, %v170
    %v193 = vmul.f32 %v191, %v175
    %s194 = sadd.s32 %s189, 1
    %s195 = sld [smem:[#allocation2 + %s194]]
    %v196 = vstv %s195
    %v197 = vmul.f32 %v196, %v180
    %v198 = vmul.f32 %v196, %v185
    %v199 = vadd.f32 %v192, %v197
    %v200 = vadd.f32 %v193, %v198
    %201 = vst.msk [vmem:[#allocation9] sm:$0xff] %vm66, %v199
    %202 = vst.msk [vmem:[#allocation9 + $0x8] sm:$0xff] %vm66, %v200
    %s203 = sadd.s32 1, %s188
    %s204 = smul.u32 %s203, 128
    %s205 = sld [smem:[#allocation2 + %s204]]
    %v206 = vstv %s205
    %v207 = vmul.f32 %v206, %v170
    %v208 = vmul.f32 %v206, %v175
    %s209 = sadd.s32 %s204, 1
    %s210 = sld [smem:[#allocation2 + %s209]]
    %v211 = vstv %s210
    %v212 = vmul.f32 %v211, %v180
    %v213 = vmul.f32 %v211, %v185
    %v214 = vadd.f32 %v207, %v212
    %v215 = vadd.f32 %v208, %v213
    %216 = vst.msk [vmem:[#allocation9 + $0x10] sm:$0xff] %vm66, %v214
    %217 = vst.msk [vmem:[#allocation9 + $0x18] sm:$0xff] %vm66, %v215
    // Predicated region
    $region26: #{tpu_custom_call.1} parent=1 // pred_check
      _
    $region27: #{tpu_custom_call.1} parent=1 // pred_check_branch
      %219 = sbr.rel (0) target = $region29
    $region28: #{tpu_custom_call.1} parent=1 // pred_region
      %s221 = ssub.s32 512, 512
      %222 = vsyncadd [#allocation4], %s221
      %s223 = sshll.u32 [#allocation9], 4
      %s224 = int_to_ptr.vmem [resolvable:$true] %s223
      %229 = dma.vmem_to_hbm [thread:$0]  %s224, 512, %s3, [#allocation4], 128, 128, 8
    $region29: #{tpu_custom_call.1} parent=1 // pred_fallthru
      _
    // Predicated region
    $region30: #{tpu_custom_call.1} parent=1 // pred_check
      _
    $region31: #{tpu_custom_call.1} parent=1 // pred_check_branch
      %231 = sbr.rel (0) target = $region33
    $region32: #{tpu_custom_call.1} parent=1 // pred_region
      %232 = dma.done [#allocation4], 512
    $region33: #{tpu_custom_call.1} parent=1 // pred_fallthru
      _
    %233 = vsyncpa [#allocation3], 1
    %234 = vsyncpa [#allocation8], 1
    %235 = vsyncpa [#allocation4], 1
    %236 = vsyncpa [#allocation5], 1

</llo_original>
